<compile_context>
chip_gen: v6e
topology: v6e:2x2x1
jax: 0.10.0
libtpu: 0.0.40
codegen_flags: <defaults>
</compile_context>

<pallas_src>
import jax
import jax.numpy as jnp
from jax.experimental import pallas as pl
from jax.experimental.pallas import tpu as pltpu


LANE = 128           # lane width / hidden padding target (do NOT pad beyond 128)
MAX_TB = 2048        # max batch rows per grid step (VMEM-safe on v5e's 16 MiB default)


def _round_up(x, m):
    return ((x + m - 1) // m) * m


# ---------------------------------------------------------------------------
# Kernel
# ---------------------------------------------------------------------------
def qnetwork_kernel(state_ref, action_ref,
                    w1s_ref, w1a_ref, b1_ref,
                    w2_ref, b2_ref,
                    w3_ref, b3_ref,
                    w4_ref, b4_ref,
                    o_ref):
    """Fused 4-layer MLP: bf16 MXU matmuls, f32 accumulation, f32 bias/ReLU."""
    # Inputs arrive as raw f32 straight from HBM; cast on the VPU (free under MXU).
    s = state_ref[...].astype(jnp.bfloat16)    # (TB, S)
    a = action_ref[...].astype(jnp.bfloat16)   # (TB, A)

    # Layer 1: concat(state, action) @ W1  ==  state @ W1s + action @ W1a
    h1 = (jnp.dot(s, w1s_ref[...], preferred_element_type=jnp.float32)
          + jnp.dot(a, w1a_ref[...], preferred_element_type=jnp.float32)
          + b1_ref[...])
    h1 = jnp.maximum(h1, 0.0)

    # Layer 2
    h2 = jnp.dot(h1.astype(jnp.bfloat16), w2_ref[...],
                 preferred_element_type=jnp.float32) + b2_ref[...]
    h2 = jnp.maximum(h2, 0.0)

    # Layer 3
    h3 = jnp.dot(h2.astype(jnp.bfloat16), w3_ref[...],
                 preferred_element_type=jnp.float32) + b3_ref[...]
    h3 = jnp.maximum(h3, 0.0)

    # Layer 4 (out_features == 1), emitted lane-dense as a (1, TB) row:
    #   q_row = w4 @ h3^T   (standard NT matmul form, like attention scores)
    h3_b = h3.astype(jnp.bfloat16)
    q = jnp.dot(w4_ref[...], h3_b.T,
                preferred_element_type=jnp.float32) + b4_ref[...]   # (1, TB) f32
    o_ref[...] = q.astype(o_ref.dtype)


# ---------------------------------------------------------------------------
# Wrapper
# ---------------------------------------------------------------------------
@jax.jit
def qnetwork_forward(state, action, kparams):
    """Run the fused MLP kernel. state:(B,S) action:(B,A) f32 -> (B,1) f32."""
    (w1s, w1a, b1, w2, b2, w3, b3, w4, b4) = kparams
    B, S = state.shape
    A = action.shape[1]

    # Batch tiling:
    #  * B <= MAX_TB: a single block (step overhead dominates; one step is best).
    #  * B  > MAX_TB: >= 2 blocks so v7x megacore can split the batch across its
    #    two TensorCores, each block capped at MAX_TB for VMEM safety.
    if B <= MAX_TB:
        TB = _round_up(B, 8)
    else:
        TB = min(MAX_TB, _round_up(pl.cdiv(B, 2), LANE))
    num_blocks = pl.cdiv(B, TB)
    Bp = num_blocks * TB

    def row_spec(shape):
        # Batch-tiled input; edge block (if B % TB != 0) is a masked partial block.
        return pl.BlockSpec(shape, lambda i: (i, 0))

    def const_spec(shape):
        # Same block index every grid step -> weight stays resident in VMEM.
        return pl.BlockSpec(shape, lambda i: (0, 0))

    out = pl.pallas_call(
        qnetwork_kernel,
        out_shape=jax.ShapeDtypeStruct((1, Bp), jnp.float32),   # lane-dense row
        grid=(num_blocks,),
        in_specs=[
            row_spec((TB, S)),          # state  (f32, cast in kernel)
            row_spec((TB, A)),          # action (f32, cast in kernel)
            const_spec(w1s.shape),      # W1[:S]   (S, Hp)   bf16
            const_spec(w1a.shape),      # W1[S:]   (A, Hp)   bf16
            const_spec(b1.shape),       # (1, Hp)  f32
            const_spec(w2.shape),       # (Hp, Hp) bf16
            const_spec(b2.shape),       # (1, Hp)  f32
            const_spec(w3.shape),       # (Hp, Hp) bf16
            const_spec(b3.shape),       # (1, Hp)  f32
            const_spec(w4.shape),       # (1, Hp)  bf16 (row vector)
            const_spec(b4.shape),       # (1, 1)   f32
        ],
        out_specs=pl.BlockSpec((1, TB), lambda i: (0, i)),
        compiler_params=pltpu.CompilerParams(
            dimension_semantics=("parallel",),
            vmem_limit_bytes=32 * 1024 * 1024),
    )(state, action, w1s, w1a, b1, w2, b2, w3, b3, w4, b4)

    # Drop garbage columns from padded batch rows, back to the (B, 1) column.
    return out[0, :B].reshape(B, 1)


# ---------------------------------------------------------------------------
# Parameter construction
# ---------------------------------------------------------------------------
def init_params(key, state_dim, action_dim, hidden_dim):
    """Torch-like init: U(-1/sqrt(fan_in), 1/sqrt(fan_in)); small uniform on linear4.
    Weights stored as (in_features, out_features) so y = x @ W + b."""
    def linear(key, fan_in, fan_out, bound=None):
        kw, kb = jax.random.split(key)
        if bound is None:
            bound = 1.0 / jnp.sqrt(fan_in)
        w = jax.random.uniform(kw, (fan_in, fan_out), jnp.float32, -bound, bound)
        b = jax.random.uniform(kb, (1, fan_out), jnp.float32, -bound, bound)
        return w, b

    in_dim = state_dim + action_dim
    k1, k2, k3, k4 = jax.random.split(key, 4)
    w1, b1 = linear(k1, in_dim, hidden_dim)
    w2, b2 = linear(k2, hidden_dim, hidden_dim)
    w3, b3 = linear(k3, hidden_dim, hidden_dim)
    w4, b4 = linear(k4, hidden_dim, 1, bound=3e-3)   # linear_weights_init
    return (w1, b1, w2, b2, w3, b3, w4, b4)


def prepare_params(params, state_dim, hidden_dim):
    """Split W1 into state/action parts, zero-pad hidden dim to 128 lanes
    (mathematically exact through the ReLUs), cast matmul weights to bf16."""
    (w1, b1, w2, b2, w3, b3, w4, b4) = params
    hp = _round_up(hidden_dim, LANE)

    def pad_cols(x, n):
        return jnp.pad(x, ((0, 0), (0, n - x.shape[1])))

    def pad_rows(x, n):
        return jnp.pad(x, ((0, n - x.shape[0]), (0, 0)))

    w1s = pad_cols(w1[:state_dim], hp).astype(jnp.bfloat16)
    w1a = pad_cols(w1[state_dim:], hp).astype(jnp.bfloat16)
    b1p = pad_cols(b1, hp)                                    # f32
    w2p = pad_cols(pad_rows(w2, hp), hp).astype(jnp.bfloat16)
    b2p = pad_cols(b2, hp)
    w3p = pad_cols(pad_rows(w3, hp), hp).astype(jnp.bfloat16)
    b3p = pad_cols(b3, hp)
    w4r = pad_cols(w4.T, hp).astype(jnp.bfloat16)             # (1, hp) bf16
    b4p = b4.reshape(1, 1)                                    # (1, 1)  f32
    return (w1s, w1a, b1p, w2p, b2p, w3p, b3p, w4r, b4p)


# ---------------------------------------------------------------------------
# Pure-JAX reference with identical numerics (bf16 matmuls, f32 accumulation)
# ---------------------------------------------------------------------------
def reference_forward(state, action, kparams):
    (w1s, w1a, b1, w2, b2, w3, b3, w4, b4) = kparams
    s = state.astype(jnp.bfloat16)
    a = action.astype(jnp.bfloat16)
    h = (jnp.dot(s, w1s, preferred_element_type=jnp.float32)
         + jnp.dot(a, w1a, preferred_element_type=jnp.float32) + b1)
    h = jnp.maximum(h, 0.0)
    h = jnp.dot(h.astype(jnp.bfloat16), w2, preferred_element_type=jnp.float32) + b2
    h = jnp.maximum(h, 0.0)
    h = jnp.dot(h.astype(jnp.bfloat16), w3, preferred_element_type=jnp.float32) + b3
    h = jnp.maximum(h, 0.0)
    return jnp.dot(h.astype(jnp.bfloat16), w4.T,
                   preferred_element_type=jnp.float32) + b4


if __name__ == "__main__":
    STATE_DIM, ACTION_DIM, HIDDEN = 16, 4, 32

    key = jax.random.PRNGKey(0)
    k_state, k_action, k_params = jax.random.split(key, 3)

    raw_params = init_params(k_params, STATE_DIM, ACTION_DIM, HIDDEN)
    kparams = prepare_params(raw_params, STATE_DIM, HIDDEN)

    # --- small batch (single block, partial in sublanes) ---
    B = 8
    state = jax.random.normal(k_state, (B, STATE_DIM), jnp.float32)
    action = jax.random.normal(k_action, (B, ACTION_DIM), jnp.float32)

    q = jax.block_until_ready(qnetwork_forward(state, action, kparams))
    q_ref = reference_forward(state, action, kparams)
    assert q.shape == (B, 1)
    assert jnp.allclose(q, q_ref, atol=1e-3, rtol=1e-3)

    # --- non-multiple-of-8 batch, still a single block ---
    B2 = 300
    state2 = jax.random.normal(jax.random.PRNGKey(1), (B2, STATE_DIM), jnp.float32)
    action2 = jax.random.normal(jax.random.PRNGKey(2), (B2, ACTION_DIM), jnp.float32)

    q2 = jax.block_until_ready(qnetwork_forward(state2, action2, kparams))
    q2_ref = reference_forward(state2, action2, kparams)
    assert q2.shape == (B2, 1)
    assert jnp.allclose(q2, q2_ref, atol=1e-3, rtol=1e-3)

    # --- large batch exercising the multi-block / megacore path (grid > 1,
    #     partial last block) ---
    B3 = 5000
    state3 = jax.random.normal(jax.random.PRNGKey(3), (B3, STATE_DIM), jnp.float32)
    action3 = jax.random.normal(jax.random.PRNGKey(4), (B3, ACTION_DIM), jnp.float32)

    q3 = jax.block_until_ready(qnetwork_forward(state3, action3, kparams))
    q3_ref = reference_forward(state3, action3, kparams)
    assert q3.shape == (B3, 1)
    assert jnp.allclose(q3, q3_ref, atol=1e-3, rtol=1e-3)

    print("KERNEL_OK")
</pallas_src>

<mosaic_0001>
module attributes {stable_mosaic.version = 11 : i64} {
  func.func @qnetwork_kernel(%arg0: i32, %arg1: memref<8x16xf32, #tpu.memory_space<vmem>>, %arg2: memref<8x4xf32, #tpu.memory_space<vmem>>, %arg3: memref<16x128xbf16, #tpu.memory_space<vmem>>, %arg4: memref<4x128xbf16, #tpu.memory_space<vmem>>, %arg5: memref<1x128xf32, #tpu.memory_space<vmem>>, %arg6: memref<128x128xbf16, #tpu.memory_space<vmem>>, %arg7: memref<1x128xf32, #tpu.memory_space<vmem>>, %arg8: memref<128x128xbf16, #tpu.memory_space<vmem>>, %arg9: memref<1x128xf32, #tpu.memory_space<vmem>>, %arg10: memref<1x128xbf16, #tpu.memory_space<vmem>>, %arg11: memref<1x1xf32, #tpu.memory_space<vmem>>, %arg12: memref<1x8xf32, #tpu.memory_space<vmem>>) attributes {dimension_semantics = [#tpu.dimension_semantics<parallel>], iteration_bounds = array<i64: 1>, scalar_prefetch = 0 : i64, scratch_operands = 0 : i64, tpu.core_type = #tpu.core_type<tc>, window_params = [{transform_indices = @transform_0, window_bounds = array<i64: 8, 16>}, {transform_indices = @transform_1, window_bounds = array<i64: 8, 4>}, {pipeline_mode = #tpu.pipeline_mode<synchronous>, transform_indices = @transform_2, window_bounds = array<i64: 16, 128>}, {pipeline_mode = #tpu.pipeline_mode<synchronous>, transform_indices = @transform_3, window_bounds = array<i64: 4, 128>}, {pipeline_mode = #tpu.pipeline_mode<synchronous>, transform_indices = @transform_4, window_bounds = array<i64: 1, 128>}, {pipeline_mode = #tpu.pipeline_mode<synchronous>, transform_indices = @transform_5, window_bounds = array<i64: 128, 128>}, {pipeline_mode = #tpu.pipeline_mode<synchronous>, transform_indices = @transform_6, window_bounds = array<i64: 1, 128>}, {pipeline_mode = #tpu.pipeline_mode<synchronous>, transform_indices = @transform_7, window_bounds = array<i64: 128, 128>}, {pipeline_mode = #tpu.pipeline_mode<synchronous>, transform_indices = @transform_8, window_bounds = array<i64: 1, 128>}, {pipeline_mode = #tpu.pipeline_mode<synchronous>, transform_indices = @transform_9, window_bounds = array<i64: 1, 128>}, {pipeline_mode = #tpu.pipeline_mode<synchronous>, transform_indices = @transform_10, window_bounds = array<i64: 1, 1>}, {transform_indices = @transform_11, window_bounds = array<i64: 1, 8>}]} {
    %c0 = arith.constant 0 : index
    %c0_0 = arith.constant 0 : index
    %0 = vector.load %arg1[%c0, %c0_0] : memref<8x16xf32, #tpu.memory_space<vmem>>, vector<8x16xf32>
    %1 = arith.truncf %0 : vector<8x16xf32> to vector<8x16xbf16>
    %c0_1 = arith.constant 0 : index
    %c0_2 = arith.constant 0 : index
    %2 = vector.load %arg2[%c0_1, %c0_2] : memref<8x4xf32, #tpu.memory_space<vmem>>, vector<8x4xf32>
    %3 = arith.truncf %2 : vector<8x4xf32> to vector<8x4xbf16>
    %c0_3 = arith.constant 0 : index
    %c0_4 = arith.constant 0 : index
    %4 = vector.load %arg3[%c0_3, %c0_4] : memref<16x128xbf16, #tpu.memory_space<vmem>>, vector<16x128xbf16>
    %cst = arith.constant dense<0.000000e+00> : vector<8x128xf32>
    %5 = tpu.matmul %1, %4, %cst {dimension_numbers = #tpu.dot_dimension_numbers<[1], [0], [0], [1], [0, 0, 1, 1], [], []>} : vector<8x16xbf16>, vector<16x128xbf16>, vector<8x128xf32> -> vector<8x128xf32>
    %c0_5 = arith.constant 0 : index
    %c0_6 = arith.constant 0 : index
    %6 = vector.load %arg4[%c0_5, %c0_6] : memref<4x128xbf16, #tpu.memory_space<vmem>>, vector<4x128xbf16>
    %cst_7 = arith.constant dense<0.000000e+00> : vector<8x128xf32>
    %7 = tpu.matmul %3, %6, %cst_7 {dimension_numbers = #tpu.dot_dimension_numbers<[1], [0], [0], [1], [0, 0, 1, 1], [], []>} : vector<8x4xbf16>, vector<4x128xbf16>, vector<8x128xf32> -> vector<8x128xf32>
    %8 = arith.addf %5, %7 : vector<8x128xf32>
    %c0_8 = arith.constant 0 : index
    %c0_9 = arith.constant 0 : index
    %9 = vector.load %arg5[%c0_8, %c0_9] : memref<1x128xf32, #tpu.memory_space<vmem>>, vector<1x128xf32>
    %10 = vector.broadcast %9 : vector<1x128xf32> to vector<8x128xf32>
    %11 = arith.addf %8, %10 : vector<8x128xf32>
    %cst_10 = arith.constant 0.000000e+00 : f32
    %12 = vector.broadcast %cst_10 : f32 to vector<8x128xf32>
    %13 = arith.maximumf %11, %12 : vector<8x128xf32>
    %14 = arith.truncf %13 : vector<8x128xf32> to vector<8x128xbf16>
    %c0_11 = arith.constant 0 : index
    %c0_12 = arith.constant 0 : index
    %15 = vector.load %arg6[%c0_11, %c0_12] : memref<128x128xbf16, #tpu.memory_space<vmem>>, vector<128x128xbf16>
    %cst_13 = arith.constant dense<0.000000e+00> : vector<8x128xf32>
    %16 = tpu.matmul %14, %15, %cst_13 {dimension_numbers = #tpu.dot_dimension_numbers<[1], [0], [0], [1], [0, 0, 1, 1], [], []>} : vector<8x128xbf16>, vector<128x128xbf16>, vector<8x128xf32> -> vector<8x128xf32>
    %c0_14 = arith.constant 0 : index
    %c0_15 = arith.constant 0 : index
    %17 = vector.load %arg7[%c0_14, %c0_15] : memref<1x128xf32, #tpu.memory_space<vmem>>, vector<1x128xf32>
    %18 = vector.broadcast %17 : vector<1x128xf32> to vector<8x128xf32>
    %19 = arith.addf %16, %18 : vector<8x128xf32>
    %cst_16 = arith.constant 0.000000e+00 : f32
    %20 = vector.broadcast %cst_16 : f32 to vector<8x128xf32>
    %21 = arith.maximumf %19, %20 : vector<8x128xf32>
    %22 = arith.truncf %21 : vector<8x128xf32> to vector<8x128xbf16>
    %c0_17 = arith.constant 0 : index
    %c0_18 = arith.constant 0 : index
    %23 = vector.load %arg8[%c0_17, %c0_18] : memref<128x128xbf16, #tpu.memory_space<vmem>>, vector<128x128xbf16>
    %cst_19 = arith.constant dense<0.000000e+00> : vector<8x128xf32>
    %24 = tpu.matmul %22, %23, %cst_19 {dimension_numbers = #tpu.dot_dimension_numbers<[1], [0], [0], [1], [0, 0, 1, 1], [], []>} : vector<8x128xbf16>, vector<128x128xbf16>, vector<8x128xf32> -> vector<8x128xf32>
    %c0_20 = arith.constant 0 : index
    %c0_21 = arith.constant 0 : index
    %25 = vector.load %arg9[%c0_20, %c0_21] : memref<1x128xf32, #tpu.memory_space<vmem>>, vector<1x128xf32>
    %26 = vector.broadcast %25 : vector<1x128xf32> to vector<8x128xf32>
    %27 = arith.addf %24, %26 : vector<8x128xf32>
    %cst_22 = arith.constant 0.000000e+00 : f32
    %28 = vector.broadcast %cst_22 : f32 to vector<8x128xf32>
    %29 = arith.maximumf %27, %28 : vector<8x128xf32>
    %30 = arith.truncf %29 : vector<8x128xf32> to vector<8x128xbf16>
    %c0_23 = arith.constant 0 : index
    %c0_24 = arith.constant 0 : index
    %31 = vector.load %arg10[%c0_23, %c0_24] : memref<1x128xbf16, #tpu.memory_space<vmem>>, vector<1x128xbf16>
    %32 = tpu.transpose %30, [1, 0] : vector<8x128xbf16> -> vector<128x8xbf16>
    %cst_25 = arith.constant dense<0.000000e+00> : vector<1x8xf32>
    %33 = tpu.matmul %31, %32, %cst_25 {dimension_numbers = #tpu.dot_dimension_numbers<[1], [0], [0], [1], [0, 0, 1, 1], [], []>} : vector<1x128xbf16>, vector<128x8xbf16>, vector<1x8xf32> -> vector<1x8xf32>
    %c0_26 = arith.constant 0 : index
    %c0_27 = arith.constant 0 : index
    %34 = vector.load %arg11[%c0_26, %c0_27] : memref<1x1xf32, #tpu.memory_space<vmem>>, vector<1x1xf32>
    %35 = vector.broadcast %34 : vector<1x1xf32> to vector<1x8xf32>
    %36 = arith.addf %33, %35 : vector<1x8xf32>
    %c0_28 = arith.constant 0 : index
    %c0_29 = arith.constant 0 : index
    %37 = vector.load %arg12[%c0_28, %c0_29] : memref<1x8xf32, #tpu.memory_space<vmem>>, vector<1x8xf32>
    tpu.vector_store %arg12[%c0_28, %c0_29], %36 {strides = array<i32>} : memref<1x8xf32, #tpu.memory_space<vmem>>, vector<1x8xf32>,
    return
  }
  func.func @transform_0(%arg0: i32) -> (i32, i32) {
    %c0_i32 = arith.constant 0 : i32
    %c0_i32_0 = arith.constant 0 : i32
    return %arg0, %c0_i32 : i32, i32
  }
  func.func @transform_1(%arg0: i32) -> (i32, i32) {
    %c0_i32 = arith.constant 0 : i32
    %c0_i32_0 = arith.constant 0 : i32
    return %arg0, %c0_i32 : i32, i32
  }
  func.func @transform_2(%arg0: i32) -> (i32, i32) {
    %c0_i32 = arith.constant 0 : i32
    %c0_i32_0 = arith.constant 0 : i32
    %c0_i32_1 = arith.constant 0 : i32
    return %c0_i32, %c0_i32_0 : i32, i32
  }
  func.func @transform_3(%arg0: i32) -> (i32, i32) {
    %c0_i32 = arith.constant 0 : i32
    %c0_i32_0 = arith.constant 0 : i32
    %c0_i32_1 = arith.constant 0 : i32
    return %c0_i32, %c0_i32_0 : i32, i32
  }
  func.func @transform_4(%arg0: i32) -> (i32, i32) {
    %c0_i32 = arith.constant 0 : i32
    %c0_i32_0 = arith.constant 0 : i32
    %c0_i32_1 = arith.constant 0 : i32
    return %c0_i32, %c0_i32_0 : i32, i32
  }
  func.func @transform_5(%arg0: i32) -> (i32, i32) {
    %c0_i32 = arith.constant 0 : i32
    %c0_i32_0 = arith.constant 0 : i32
    %c0_i32_1 = arith.constant 0 : i32
    return %c0_i32, %c0_i32_0 : i32, i32
  }
  func.func @transform_6(%arg0: i32) -> (i32, i32) {
    %c0_i32 = arith.constant 0 : i32
    %c0_i32_0 = arith.constant 0 : i32
    %c0_i32_1 = arith.constant 0 : i32
    return %c0_i32, %c0_i32_0 : i32, i32
  }
  func.func @transform_7(%arg0: i32) -> (i32, i32) {
    %c0_i32 = arith.constant 0 : i32
    %c0_i32_0 = arith.constant 0 : i32
    %c0_i32_1 = arith.constant 0 : i32
    return %c0_i32, %c0_i32_0 : i32, i32
  }
  func.func @transform_8(%arg0: i32) -> (i32, i32) {
    %c0_i32 = arith.constant 0 : i32
    %c0_i32_0 = arith.constant 0 : i32
    %c0_i32_1 = arith.constant 0 : i32
    return %c0_i32, %c0_i32_0 : i32, i32
  }
  func.func @transform_9(%arg0: i32) -> (i32, i32) {
    %c0_i32 = arith.constant 0 : i32
    %c0_i32_0 = arith.constant 0 : i32
    %c0_i32_1 = arith.constant 0 : i32
    return %c0_i32, %c0_i32_0 : i32, i32
  }
  func.func @transform_10(%arg0: i32) -> (i32, i32) {
    %c0_i32 = arith.constant 0 : i32
    %c0_i32_0 = arith.constant 0 : i32
    %c0_i32_1 = arith.constant 0 : i32
    return %c0_i32, %c0_i32_0 : i32, i32
  }
  func.func @transform_11(%arg0: i32) -> (i32, i32) {
    %c0_i32 = arith.constant 0 : i32
    %c0_i32_0 = arith.constant 0 : i32
    return %c0_i32, %arg0 : i32, i32
  }
}

</mosaic_0001>

<llo_original>
// kernel: qnetwork_forward.1
$region0: #{qnetwork_forward.1}
  #allocation0 [shape = 'u32[]', space=smem, size = 0x4, offset = 0x4, fixed_abs, tag = 'smem constant byte address 0x4 - core index']
  #allocation1 [shape = 'u32[144,128]{1,0:T(1,128)}', space=vmem, size = 0x12000, scoped, tag = 'internal scratch']
  #allocation2 [shape = 'f32[1,1]{1,0:T(1,128)S(1)}', space=vmem, size = 0x200, scoped, tag = 'scoped memory for qnetwork_forward.1']
  %s0 = inlined_call_operand.vmem [shape: f32[8,16], index: 0, kind: input, shape index: {}]
  %s1 = inlined_call_operand.vmem [shape: f32[8,4], index: 1, kind: input, shape index: {}]
  %s2 = inlined_call_operand.vmem [shape: bf16[16,128], index: 2, kind: input, shape index: {}]
  %s3 = inlined_call_operand.vmem [shape: bf16[4,128], index: 3, kind: input, shape index: {}]
  %s4 = inlined_call_operand.vmem [shape: f32[1,128], index: 4, kind: input, shape index: {}]
  %s5 = inlined_call_operand.hbm [shape: bf16[128,128], index: 5, kind: input, shape index: {}]
  %s6 = inlined_call_operand.vmem [shape: f32[1,128], index: 6, kind: input, shape index: {}]
  %s7 = inlined_call_operand.hbm [shape: bf16[128,128], index: 7, kind: input, shape index: {}]
  %s8 = inlined_call_operand.vmem [shape: f32[1,128], index: 8, kind: input, shape index: {}]
  %s9 = inlined_call_operand.vmem [shape: bf16[1,128], index: 9, kind: input, shape index: {}]
  %s10 = inlined_call_operand.<no memory space> [shape: f32[1,1], index: 10, kind: input, shape index: {}]
  %s11 = inlined_call_operand.hbm [shape: f32[1,8], index: 11, kind: output, shape index: {}]
  %s12 = sld [smem:[#allocation0]]
  $region62: #{qnetwork_forward.1} parent=0
    _
  %s14 = ssub.s32 1, %s12
  %s15 = scalar_select 0, %s14, %s12
  %v16 = vstv %s10
  %17 = vst [vmem:[#allocation2] sm:$0x1] %v16
  $region1: #{qnetwork_forward.1} parent=0
    #allocation3 [shape = 'u8[32768]{0}', space=vmem, size = 0x8000, scoped, tag = 'input window, operand 5, single buffered']
    #allocation4 [shape = 's32[1]{0}', space=sflag, size = 0x4, scoped, tag = 'scoped memory for qnetwork_forward.1']
    #allocation5 [shape = 's32[1]{0}', space=sflag, size = 0x4, scoped, tag = 'scoped memory for qnetwork_forward.1']
    #allocation6 [shape = 'u8[32768]{0}', space=vmem, size = 0x8000, scoped, tag = 'input window, operand 7, single buffered']
    #allocation7 [shape = 's32[1]{0}', space=sflag, size = 0x4, scoped, tag = 'scoped memory for qnetwork_forward.1']
    #allocation8 [shape = 'u8[512]{0}', space=vmem, size = 0x400, scoped, tag = 'output window, operand 0, single buffered']
    %18 = vsyncpa [#allocation4], 0
    %19 = vsyncpa [#allocation7], 0
    %20 = vsyncpa [#allocation5], 0
    // Predicated region
    $region2: #{qnetwork_forward.1} parent=1 // pred_check
      _
    $region3: #{qnetwork_forward.1} parent=1 // pred_check_branch
      %22 = sbr.rel (0) target = $region5
    $region4: #{qnetwork_forward.1} parent=1 // pred_region
      _
    $region5: #{qnetwork_forward.1} parent=1 // pred_fallthru
      _
    // Predicated region
    $region6: #{qnetwork_forward.1} parent=1 // pred_check
      _
    $region7: #{qnetwork_forward.1} parent=1 // pred_check_branch
      %24 = sbr.rel (0) target = $region9
    $region8: #{qnetwork_forward.1} parent=1 // pred_region
      _
    $region9: #{qnetwork_forward.1} parent=1 // pred_fallthru
      _
    // Predicated region
    $region10: #{qnetwork_forward.1} parent=1 // pred_check
      _
    $region11: #{qnetwork_forward.1} parent=1 // pred_check_branch
      %26 = sbr.rel (0) target = $region13
    $region12: #{qnetwork_forward.1} parent=1 // pred_region
      _
    $region13: #{qnetwork_forward.1} parent=1 // pred_fallthru
      _
    // Predicated region
    $region14: #{qnetwork_forward.1} parent=1 // pred_check
      _
    $region15: #{qnetwork_forward.1} parent=1 // pred_check_branch
      %28 = sbr.rel (0) target = $region17
    $region16: #{qnetwork_forward.1} parent=1 // pred_region
      _
    $region17: #{qnetwork_forward.1} parent=1 // pred_fallthru
      _
    // Predicated region
    $region18: #{qnetwork_forward.1} parent=1 // pred_check
      _
    $region19: #{qnetwork_forward.1} parent=1 // pred_check_branch
      %30 = sbr.rel (0) target = $region21
    $region20: #{qnetwork_forward.1} parent=1 // pred_region
      _
    $region21: #{qnetwork_forward.1} parent=1 // pred_fallthru
      _
    // Predicated region
    $region22: #{qnetwork_forward.1} parent=1 // pred_check
      _
    $region23: #{qnetwork_forward.1} parent=1 // pred_check_branch
      %32 = sbr.rel (0) target = $region25
    $region24: #{qnetwork_forward.1} parent=1 // pred_region
      %s34 = ssub.s32 1024, 1024
      %35 = vsyncadd [#allocation4], %s34
      %s36 = sshll.u32 [#allocation3], 4
      %s37 = int_to_ptr.vmem [resolvable:$true] %s36
      %42 = dma.hbm_to_vmem [thread:$0]  %s5, 1024, %s37, [#allocation4], 64, 64, 4
    $region25: #{qnetwork_forward.1} parent=1 // pred_fallthru
      _
    // Predicated region
    $region26: #{qnetwork_forward.1} parent=1 // pred_check
      _
    $region27: #{qnetwork_forward.1} parent=1 // pred_check_branch
      %44 = sbr.rel (0) target = $region29
    $region28: #{qnetwork_forward.1} parent=1 // pred_region
      _
    $region29: #{qnetwork_forward.1} parent=1 // pred_fallthru
      _
    // Predicated region
    $region30: #{qnetwork_forward.1} parent=1 // pred_check
      _
    $region31: #{qnetwork_forward.1} parent=1 // pred_check_branch
      %46 = sbr.rel (0) target = $region33
    $region32: #{qnetwork_forward.1} parent=1 // pred_region
      %s48 = ssub.s32 1024, 1024
      %49 = vsyncadd [#allocation7], %s48
      %s50 = sshll.u32 [#allocation6], 4
      %s51 = int_to_ptr.vmem [resolvable:$true] %s50
      %56 = dma.hbm_to_vmem [thread:$0]  %s7, 1024, %s51, [#allocation7], 64, 64, 4
    $region33: #{qnetwork_forward.1} parent=1 // pred_fallthru
      _
    // Predicated region
    $region34: #{qnetwork_forward.1} parent=1 // pred_check
      _
    $region35: #{qnetwork_forward.1} parent=1 // pred_check_branch
      %58 = sbr.rel (0) target = $region37
    $region36: #{qnetwork_forward.1} parent=1 // pred_region
      _
    $region37: #{qnetwork_forward.1} parent=1 // pred_fallthru
      _
    // Predicated region
    $region38: #{qnetwork_forward.1} parent=1 // pred_check
      _
    $region39: #{qnetwork_forward.1} parent=1 // pred_check_branch
      %60 = sbr.rel (0) target = $region41
    $region40: #{qnetwork_forward.1} parent=1 // pred_region
      _
    $region41: #{qnetwork_forward.1} parent=1 // pred_fallthru
      _
    // Predicated region
    $region42: #{qnetwork_forward.1} parent=1 // pred_check
      _
    $region43: #{qnetwork_forward.1} parent=1 // pred_check_branch
      %62 = sbr.rel (0) target = $region45
    $region44: #{qnetwork_forward.1} parent=1 // pred_region
      _
    $region45: #{qnetwork_forward.1} parent=1 // pred_fallthru
      _
    // Predicated region
    $region46: #{qnetwork_forward.1} parent=1 // pred_check
      _
    $region47: #{qnetwork_forward.1} parent=1 // pred_check_branch
      %64 = sbr.rel (0) target = $region49
    $region48: #{qnetwork_forward.1} parent=1 // pred_region
      %65 = dma.done [#allocation4], 1024
    $region49: #{qnetwork_forward.1} parent=1 // pred_fallthru
      _
    // Predicated region
    $region50: #{qnetwork_forward.1} parent=1 // pred_check
      _
    $region51: #{qnetwork_forward.1} parent=1 // pred_check_branch
      %67 = sbr.rel (0) target = $region53
    $region52: #{qnetwork_forward.1} parent=1 // pred_region
      %68 = dma.done [#allocation7], 1024
    $region53: #{qnetwork_forward.1} parent=1 // pred_fallthru
      _
    %v70 = vld [vmem:[%s0] sm:$0xff]
    %v71 = vpack.c.bf16 %v70, %v70
    %v72 = vld [vmem:[%s1] sm:$0xff]
    %v73 = vpack.c.bf16 %v72, %v72
    %v74 = vld [vmem:[%s2] sm:$0xf]
    %v75 = vld [vmem:[%s2 + $0x4] sm:$0xf]
    %v76 = vld [vmem:[%s3] sm:$0x3]
    %vm77 = vcmask 31744
    %v79 = vsel %vm77, %v73, 0
    %vm81 = vcmask 1041408
    %v83 = vsel %vm81, %v76, 0
    %85 = vmatprep.subr.bf16.mxu0 0
    %86 = vmatpush1.bf16.msra.mxu0 0
    %87 = vmatprep.subr.bf16.mxu0 0
    %88 = vmatpush1.bf16.msra.mxu0 0
    %89 = vmatprep.subr.bf16.mxu0 0
    %90 = vmatpush1.bf16.msra.mxu0 0
    %91 = vmatprep.subr.bf16.mxu0 0
    %92 = vmatpush1.bf16.msra.mxu0 0
    %93 = vmatprep.subr.bf16.mxu0 0
    %94 = vmatpush1.bf16.msra.mxu0 0
    %95 = vmatprep.subr.bf16.mxu0 0
    %96 = vmatpush1.bf16.msra.mxu0 0
    %97 = vmatprep.subr.bf16.mxu0 0
    %98 = vmatpush1.bf16.msra.mxu0 0
    %99 = vmatprep.subr.bf16.mxu0 0
    %100 = vmatpush1.bf16.msra.mxu0 %v83
    %101 = vmatprep.subr.bf16.mxu0 0
    %102 = vmatpush2.bf16.msra.mxu0 0
    %103 = vmatprep.subr.bf16.mxu0 0
    %104 = vmatpush2.bf16.msra.mxu0 0
    %105 = vmatprep.subr.bf16.mxu0 0
    %106 = vmatpush2.bf16.msra.mxu0 0
    %107 = vmatprep.subr.bf16.mxu0 0
    %108 = vmatpush2.bf16.msra.mxu0 0
    %109 = vmatprep.subr.bf16.mxu0 0
    %110 = vmatpush2.bf16.msra.mxu0 0
    %111 = vmatprep.subr.bf16.mxu0 0
    %112 = vmatpush2.bf16.msra.mxu0 0
    %113 = vmatprep.subr.bf16.mxu0 0
    %114 = vmatpush2.bf16.msra.mxu0 0
    %115 = vmatprep.subr.bf16.mxu0 0
    %116 = vmatpush2.bf16.msra.mxu0 0
    %117 = vmatprep.mubr.bf16.mxu0 0
    %118 = vmatmul.mubr.bf16.gmra.mxu0 %v79
    %v119 = vpop.f32.mrf.mxu0
    %v120 = vadd.f32 0.0, %v119
    %v121 = vpop.f32.mrf.mxu0
    %v122 = vpop.f32.mrf.mxu0
    %v123 = vpop.f32.mrf.mxu0
    %124 = vdwg.mxu0
    %v127 = vunpack.c.l.b16 %v74
    %v128 = vunpack.c.l.b16 %v75
    %v129 = vpack.c.b16 %v128, %v127
    %vm131 = vcmask 130048
    %v133 = vsel %vm131, %v71, 0
    %135 = vmatprep.subr.bf16.mxu0 0
    %136 = vmatpush1.bf16.msra.mxu0 0
    %137 = vmatprep.subr.bf16.mxu0 0
    %138 = vmatpush1.bf16.msra.mxu0 0
    %139 = vmatprep.subr.bf16.mxu0 0
    %140 = vmatpush1.bf16.msra.mxu0 0
    %141 = vmatprep.subr.bf16.mxu0 0
    %142 = vmatpush1.bf16.msra.mxu0 0
    %143 = vmatprep.subr.bf16.mxu0 0
    %144 = vmatpush1.bf16.msra.mxu0 0
    %145 = vmatprep.subr.bf16.mxu0 0
    %146 = vmatpush1.bf16.msra.mxu0 0
    %147 = vmatprep.subr.bf16.mxu0 0
    %148 = vmatpush1.bf16.msra.mxu0 0
    %149 = vmatprep.subr.bf16.mxu0 0
    %150 = vmatpush1.bf16.msra.mxu0 %v129
    %151 = vmatprep.subr.bf16.mxu0 0
    %152 = vmatpush2.bf16.msra.mxu0 0
    %153 = vmatprep.subr.bf16.mxu0 0
    %154 = vmatpush2.bf16.msra.mxu0 0
    %155 = vmatprep.subr.bf16.mxu0 0
    %156 = vmatpush2.bf16.msra.mxu0 0
    %157 = vmatprep.subr.bf16.mxu0 0
    %158 = vmatpush2.bf16.msra.mxu0 0
    %159 = vmatprep.subr.bf16.mxu0 0
    %160 = vmatpush2.bf16.msra.mxu0 0
    %161 = vmatprep.subr.bf16.mxu0 0
    %162 = vmatpush2.bf16.msra.mxu0 0
    %163 = vmatprep.subr.bf16.mxu0 0
    %164 = vmatpush2.bf16.msra.mxu0 0
    %165 = vmatprep.subr.bf16.mxu0 0
    %166 = vmatpush2.bf16.msra.mxu0 0
    %167 = vmatprep.mubr.bf16.mxu0 0
    %168 = vmatmul.mubr.bf16.gmra.mxu0 %v133
    %v169 = vpop.f32.mrf.mxu0
    %v170 = vadd.f32 %v120, %v169
    %v171 = vpop.f32.mrf.mxu0
    %v172 = vpop.f32.mrf.mxu0
    %v173 = vpop.f32.mrf.mxu0
    %174 = vdwg.mxu0
    %v175 = vld [vmem:[%s4] sm:$0x1]
    %v177 = vlaneseq
    %v178 = vshrl.u32 %v177, 7
    %v179 = vsub.s32 0, %v178
    %v180 = vrot.slane %v175, %v179
    %v182 = vadd.f32 %v170, %v180
    %v183 = vmax.f32 %v182, 0.0
    %v184 = vpack.c.bf16 %v183, %v183
    %v185 = vld [vmem:[#allocation3] sm:$0xf]
    %v186 = vld [vmem:[#allocation3 + $0x4] sm:$0xf]
    %v187 = vld [vmem:[#allocation3 + $0x8] sm:$0xf]
    %v188 = vld [vmem:[#allocation3 + $0xc] sm:$0xf]
    %v189 = vld [vmem:[#allocation3 + $0x10] sm:$0xf]
    %v190 = vld [vmem:[#allocation3 + $0x14] sm:$0xf]
    %v191 = vld [vmem:[#allocation3 + $0x18] sm:$0xf]
    %v192 = vld [vmem:[#allocation3 + $0x1c] sm:$0xf]
    %v193 = vld [vmem:[#allocation3 + $0x20] sm:$0xf]
    %v194 = vld [vmem:[#allocation3 + $0x24] sm:$0xf]
    %v195 = vld [vmem:[#allocation3 + $0x28] sm:$0xf]
    %v196 = vld [vmem:[#allocation3 + $0x2c] sm:$0xf]
    %v197 = vld [vmem:[#allocation3 + $0x30] sm:$0xf]
    %v198 = vld [vmem:[#allocation3 + $0x34] sm:$0xf]
    %v199 = vld [vmem:[#allocation3 + $0x38] sm:$0xf]
    %v200 = vld [vmem:[#allocation3 + $0x3c] sm:$0xf]
    %v201 = vld [vmem:[%s6] sm:$0x1]
    %v203 = vlaneseq
    %v204 = vshrl.u32 %v203, 7
    %v205 = vsub.s32 0, %v204
    %v206 = vrot.slane %v201, %v205
    %v224 = vunpack.c.l.b16 %v185
    %v225 = vunpack.c.l.b16 %v186
    %v226 = vunpack.c.l.b16 %v187
    %v227 = vunpack.c.l.b16 %v188
    %v228 = vunpack.c.l.b16 %v189
    %v229 = vunpack.c.l.b16 %v190
    %v230 = vunpack.c.l.b16 %v191
    %v231 = vunpack.c.l.b16 %v192
    %v232 = vunpack.c.l.b16 %v193
    %v233 = vunpack.c.l.b16 %v194
    %v234 = vunpack.c.l.b16 %v195
    %v235 = vunpack.c.l.b16 %v196
    %v236 = vunpack.c.l.b16 %v197
    %v237 = vunpack.c.l.b16 %v198
    %v238 = vunpack.c.l.b16 %v199
    %v239 = vunpack.c.l.b16 %v200
    %v240 = vpack.c.b16 %v225, %v224
    %v241 = vpack.c.b16 %v227, %v226
    %v242 = vpack.c.b16 %v229, %v228
    %v243 = vpack.c.b16 %v231, %v230
    %v244 = vpack.c.b16 %v233, %v232
    %v245 = vpack.c.b16 %v235, %v234
    %v246 = vpack.c.b16 %v237, %v236
    %v247 = vpack.c.b16 %v239, %v238
    %256 = vmatprep.subr.bf16.mxu0 0
    %257 = vmatpush1.bf16.msra.mxu0 %v247
    %258 = vmatprep.subr.bf16.mxu0 0
    %259 = vmatpush1.bf16.msra.mxu0 %v246
    %260 = vmatprep.subr.bf16.mxu0 0
    %261 = vmatpush1.bf16.msra.mxu0 %v245
    %262 = vmatprep.subr.bf16.mxu0 0
    %263 = vmatpush1.bf16.msra.mxu0 %v244
    %264 = vmatprep.subr.bf16.mxu0 0
    %265 = vmatpush1.bf16.msra.mxu0 %v243
    %266 = vmatprep.subr.bf16.mxu0 0
    %267 = vmatpush1.bf16.msra.mxu0 %v242
    %268 = vmatprep.subr.bf16.mxu0 0
    %269 = vmatpush1.bf16.msra.mxu0 %v241
    %270 = vmatprep.subr.bf16.mxu0 0
    %271 = vmatpush1.bf16.msra.mxu0 %v240
    %272 = vmatprep.subr.bf16.mxu0 0
    %273 = vmatpush2.bf16.msra.mxu0 0
    %274 = vmatprep.subr.bf16.mxu0 0
    %275 = vmatpush2.bf16.msra.mxu0 0
    %276 = vmatprep.subr.bf16.mxu0 0
    %277 = vmatpush2.bf16.msra.mxu0 0
    %278 = vmatprep.subr.bf16.mxu0 0
    %279 = vmatpush2.bf16.msra.mxu0 0
    %280 = vmatprep.subr.bf16.mxu0 0
    %281 = vmatpush2.bf16.msra.mxu0 0
    %282 = vmatprep.subr.bf16.mxu0 0
    %283 = vmatpush2.bf16.msra.mxu0 0
    %284 = vmatprep.subr.bf16.mxu0 0
    %285 = vmatpush2.bf16.msra.mxu0 0
    %286 = vmatprep.subr.bf16.mxu0 0
    %287 = vmatpush2.bf16.msra.mxu0 0
    %288 = vmatprep.mubr.bf16.mxu0 0
    %289 = vmatmul.mubr.bf16.gmra.mxu0 %v184
    %v290 = vpop.f32.mrf.mxu0
    %v291 = vadd.f32 %v206, %v290
    %v292 = vpop.f32.mrf.mxu0
    %v293 = vpop.f32.mrf.mxu0
    %v294 = vpop.f32.mrf.mxu0
    %295 = vdwg.mxu0
    %v296 = vmax.f32 %v291, 0.0
    %v297 = vpack.c.bf16 %v296, %v296
    %v298 = vld [vmem:[#allocation6] sm:$0xf]
    %v299 = vld [vmem:[#allocation6 + $0x4] sm:$0xf]
    %v300 = vld [vmem:[#allocation6 + $0x8] sm:$0xf]
    %v301 = vld [vmem:[#allocation6 + $0xc] sm:$0xf]
    %v302 = vld [vmem:[#allocation6 + $0x10] sm:$0xf]
    %v303 = vld [vmem:[#allocation6 + $0x14] sm:$0xf]
    %v304 = vld [vmem:[#allocation6 + $0x18] sm:$0xf]
    %v305 = vld [vmem:[#allocation6 + $0x1c] sm:$0xf]
    %v306 = vld [vmem:[#allocation6 + $0x20] sm:$0xf]
    %v307 = vld [vmem:[#allocation6 + $0x24] sm:$0xf]
    %v308 = vld [vmem:[#allocation6 + $0x28] sm:$0xf]
    %v309 = vld [vmem:[#allocation6 + $0x2c] sm:$0xf]
    %v310 = vld [vmem:[#allocation6 + $0x30] sm:$0xf]
    %v311 = vld [vmem:[#allocation6 + $0x34] sm:$0xf]
    %v312 = vld [vmem:[#allocation6 + $0x38] sm:$0xf]
    %v313 = vld [vmem:[#allocation6 + $0x3c] sm:$0xf]
    %v314 = vld [vmem:[%s8] sm:$0x1]
    %v316 = vlaneseq
    %v317 = vshrl.u32 %v316, 7
    %v318 = vsub.s32 0, %v317
    %v319 = vrot.slane %v314, %v318
    %v337 = vunpack.c.l.b16 %v298
    %v338 = vunpack.c.l.b16 %v299
    %v339 = vunpack.c.l.b16 %v300
    %v340 = vunpack.c.l.b16 %v301
    %v341 = vunpack.c.l.b16 %v302
    %v342 = vunpack.c.l.b16 %v303
    %v343 = vunpack.c.l.b16 %v304
    %v344 = vunpack.c.l.b16 %v305
    %v345 = vunpack.c.l.b16 %v306
    %v346 = vunpack.c.l.b16 %v307
    %v347 = vunpack.c.l.b16 %v308
    %v348 = vunpack.c.l.b16 %v309
    %v349 = vunpack.c.l.b16 %v310
    %v350 = vunpack.c.l.b16 %v311
    %v351 = vunpack.c.l.b16 %v312
    %v352 = vunpack.c.l.b16 %v313
    %v353 = vpack.c.b16 %v338, %v337
    %v354 = vpack.c.b16 %v340, %v339
    %v355 = vpack.c.b16 %v342, %v341
    %v356 = vpack.c.b16 %v344, %v343
    %v357 = vpack.c.b16 %v346, %v345
    %v358 = vpack.c.b16 %v348, %v347
    %v359 = vpack.c.b16 %v350, %v349
    %v360 = vpack.c.b16 %v352, %v351
    %369 = vmatprep.subr.bf16.mxu0 0
    %370 = vmatpush1.bf16.msra.mxu0 %v360
    %371 = vmatprep.subr.bf16.mxu0 0
    %372 = vmatpush1.bf16.msra.mxu0 %v359
    %373 = vmatprep.subr.bf16.mxu0 0
    %374 = vmatpush1.bf16.msra.mxu0 %v358
    %375 = vmatprep.subr.bf16.mxu0 0
    %376 = vmatpush1.bf16.msra.mxu0 %v357
    %377 = vmatprep.subr.bf16.mxu0 0
    %378 = vmatpush1.bf16.msra.mxu0 %v356
    %379 = vmatprep.subr.bf16.mxu0 0
    %380 = vmatpush1.bf16.msra.mxu0 %v355
    %381 = vmatprep.subr.bf16.mxu0 0
    %382 = vmatpush1.bf16.msra.mxu0 %v354
    %383 = vmatprep.subr.bf16.mxu0 0
    %384 = vmatpush1.bf16.msra.mxu0 %v353
    %385 = vmatprep.subr.bf16.mxu0 0
    %386 = vmatpush2.bf16.msra.mxu0 0
    %387 = vmatprep.subr.bf16.mxu0 0
    %388 = vmatpush2.bf16.msra.mxu0 0
    %389 = vmatprep.subr.bf16.mxu0 0
    %390 = vmatpush2.bf16.msra.mxu0 0
    %391 = vmatprep.subr.bf16.mxu0 0
    %392 = vmatpush2.bf16.msra.mxu0 0
    %393 = vmatprep.subr.bf16.mxu0 0
    %394 = vmatpush2.bf16.msra.mxu0 0
    %395 = vmatprep.subr.bf16.mxu0 0
    %396 = vmatpush2.bf16.msra.mxu0 0
    %397 = vmatprep.subr.bf16.mxu0 0
    %398 = vmatpush2.bf16.msra.mxu0 0
    %399 = vmatprep.subr.bf16.mxu0 0
    %400 = vmatpush2.bf16.msra.mxu0 0
    %401 = vmatprep.mubr.bf16.mxu0 0
    %402 = vmatmul.mubr.bf16.gmra.mxu0 %v297
    %v403 = vpop.f32.mrf.mxu0
    %v404 = vadd.f32 %v319, %v403
    %v405 = vpop.f32.mrf.mxu0
    %v406 = vpop.f32.mrf.mxu0
    %v407 = vpop.f32.mrf.mxu0
    %408 = vdwg.mxu0
    %v409 = vmax.f32 %v404, 0.0
    %v410 = vpack.c.bf16 %v409, %v409
    %v411 = vld [vmem:[%s9] sm:$0x1]
    %v412 = vld [vmem:[#allocation2] sm:$0x1]
    %414 = vset.pattern.permute.xlu0 0
    %415 = vperm.xlu0 %414, %v412
    %v416 = vpop.permute.xlu0 %415
    %v418 = vlaneseq
    %v419 = vshrl.u32 %v418, 7
    %v420 = vsub.s32 0, %v419
    %v421 = vrot.slane %v416, %v420
    %422 = vmatprep.subr.bf16.mxu0 0
    %423 = vmatpush1.bf16.xpose.msra.mxu0 0
    %424 = vmatprep.subr.bf16.mxu0 0
    %425 = vmatpush1.bf16.xpose.msra.mxu0 0
    %426 = vmatprep.subr.bf16.mxu0 0
    %427 = vmatpush1.bf16.xpose.msra.mxu0 0
    %428 = vmatprep.subr.bf16.mxu0 0
    %429 = vmatpush1.bf16.xpose.msra.mxu0 0
    %430 = vmatprep.subr.bf16.mxu0 0
    %431 = vmatpush1.bf16.xpose.msra.mxu0 0
    %432 = vmatprep.subr.bf16.mxu0 0
    %433 = vmatpush1.bf16.xpose.msra.mxu0 0
    %434 = vmatprep.subr.bf16.mxu0 0
    %435 = vmatpush1.bf16.xpose.msra.mxu0 0
    %436 = vmatprep.subr.bf16.mxu0 0
    %437 = vmatpush1.bf16.xpose.msra.mxu0 %v410
    %438 = vmatprep.subr.bf16.mxu0 0
    %439 = vmatpush2.bf16.xpose.msra.mxu0 0
    %440 = vmatprep.subr.bf16.mxu0 0
    %441 = vmatpush2.bf16.xpose.msra.mxu0 0
    %442 = vmatprep.subr.bf16.mxu0 0
    %443 = vmatpush2.bf16.xpose.msra.mxu0 0
    %444 = vmatprep.subr.bf16.mxu0 0
    %445 = vmatpush2.bf16.xpose.msra.mxu0 0
    %446 = vmatprep.subr.bf16.mxu0 0
    %447 = vmatpush2.bf16.xpose.msra.mxu0 0
    %448 = vmatprep.subr.bf16.mxu0 0
    %449 = vmatpush2.bf16.xpose.msra.mxu0 0
    %450 = vmatprep.subr.bf16.mxu0 0
    %451 = vmatpush2.bf16.xpose.msra.mxu0 0
    %452 = vmatprep.subr.bf16.mxu0 0
    %453 = vmatpush2.bf16.xpose.msra.mxu0 0
    %454 = vmatprep.mubr.bf16.mxu0 0
    %455 = vmatmul.mubr.bf16.gmra.mxu0 %v411
    %v456 = vpop.f32.mrf.mxu0
    %v457 = vadd.f32 %v421, %v456
    %v458 = vpop.f32.mrf.mxu0
    %v459 = vpop.f32.mrf.mxu0
    %v460 = vpop.f32.mrf.mxu0
    %461 = vdwg.mxu0
    %vm462 = vcmask 57344
    %463 = vst.msk [vmem:[#allocation8] sm:$0x1] %vm462, %v457
    // Predicated region
    $region54: #{qnetwork_forward.1} parent=1 // pred_check
      _
    $region55: #{qnetwork_forward.1} parent=1 // pred_check_branch
      %465 = sbr.rel (0) target = $region57
    $region56: #{qnetwork_forward.1} parent=1 // pred_region
      %s467 = ssub.s32 16, 16
      %468 = vsyncadd [#allocation5], %s467
      %s470 = sshll.u32 [#allocation8], 4
      %s471 = int_to_ptr.vmem [resolvable:$true] %s470
      %473 = dma.vmem_to_hbm [thread:$0]  %s471, 16, %s11, [#allocation5]
    $region57: #{qnetwork_forward.1} parent=1 // pred_fallthru
      _
    // Predicated region
    $region58: #{qnetwork_forward.1} parent=1 // pred_check
      _
    $region59: #{qnetwork_forward.1} parent=1 // pred_check_branch
      %475 = sbr.rel (0) target = $region61
    $region60: #{qnetwork_forward.1} parent=1 // pred_region
      %476 = dma.done [#allocation5], 16
    $region61: #{qnetwork_forward.1} parent=1 // pred_fallthru
      _
    %477 = vsyncpa [#allocation4], 1
    %478 = vsyncpa [#allocation7], 1
    %479 = vsyncpa [#allocation5], 1

</llo_original>
